<compile_context>
chip_gen: v7x
topology: tpu7x:2x2x1
jax: 0.10.0
libtpu: 0.0.40
codegen_flags: <defaults>
</compile_context>

<pallas_src>
import functools

import jax
import jax.numpy as jnp
from jax.experimental import pallas as pl
from jax.experimental.pallas import tpu as pltpu

LANE = 128


def _round_up(v, m):
    return (v + m - 1) // m * m


def _mlp_kernel(x_ref, w1_ref, bng_ref, w2_ref, b2_ref, o_ref, *, eps, use_bn):
    # Layer 1 on the MXU: bf16 operands, f32 accumulation.
    x_bf = x_ref[...].astype(jnp.bfloat16)
    h = jnp.dot(x_bf, w1_ref[...], preferred_element_type=jnp.float32)

    bng = bng_ref[...]            # (3, h_p) f32: rows = b1, gamma, beta
    h = h + bng[0:1, :]           # + b1

    if use_bn:
        # Training-mode BatchNorm1d (biased variance) over the full batch,
        # computed in f32.  Padded hidden columns are exactly zero and map to
        # beta_pad == 0 (requires eps > 0).
        mean = jnp.mean(h, axis=0, keepdims=True)
        centered = h - mean
        var = jnp.mean(centered * centered, axis=0, keepdims=True)
        h = centered * jax.lax.rsqrt(var + eps) * bng[1:2, :] + bng[2:3, :]

    h = jnp.maximum(h, 0.0)       # ReLU, f32

    # Layer 2 on the MXU: bf16 operands, f32 accumulation.  Zero padded-hidden
    # rows of W2 kill any padded columns of h.
    out = jnp.dot(h.astype(jnp.bfloat16), w2_ref[...],
                  preferred_element_type=jnp.float32)
    o_ref[...] = (out + b2_ref[...]).astype(o_ref.dtype)   # lane-dense store


def prepare_mlp_params(params):
    """One-time parameter padding + bf16 cast, hoisted out of the hot path."""
    w1, b1, gamma, beta, w2, b2 = params
    nfeat, nhid = w1.shape
    nclass = w2.shape[1]
    h_p = _round_up(nhid, LANE)
    c_p = _round_up(nclass, LANE)
    f32, bf16 = jnp.float32, jnp.bfloat16

    w1_p = jnp.zeros((nfeat, h_p), bf16).at[:, :nhid].set(w1.astype(bf16))
    w2_p = jnp.zeros((h_p, c_p), bf16).at[:nhid, :nclass].set(w2.astype(bf16))
    bng = jnp.zeros((3, h_p), f32)
    bng = bng.at[0, :nhid].set(b1.astype(f32))
    bng = bng.at[1, :nhid].set(gamma.astype(f32))
    bng = bng.at[2, :nhid].set(beta.astype(f32))
    b2_p = jnp.zeros((1, c_p), f32).at[0, :nclass].set(b2.astype(f32))
    return {"w1": w1_p, "bng": bng, "w2": w2_p, "b2": b2_p, "nclass": nclass}


def mlp_forward(x, prepped, *, use_bn=True, eps=1e-5, batch_tile=None):
    """Fused MLP forward.  Returns a (n, padded_classes) lane-dense slab;
    slice [:, :nclass] at the consumer."""
    w1_p, bng, w2_p, b2_p = prepped["w1"], prepped["bng"], prepped["w2"], prepped["b2"]
    n, nfeat = x.shape
    c_p = w2_p.shape[1]
    kernel = functools.partial(_mlp_kernel, eps=eps, use_bn=use_bn)
    out_shape = jax.ShapeDtypeStruct((n, c_p), jnp.float32)

    if use_bn or batch_tile is None or n % batch_tile != 0:
        # BN needs full-batch statistics -> one fused block, whole arrays
        # VMEM-resident, no grid bookkeeping.
        return pl.pallas_call(kernel, out_shape=out_shape)(
            x, w1_p, bng, w2_p, b2_p)

    # use_bn=False: batch-tiled grid.  Weights/biases on constant index maps
    # stay VMEM-resident across grid steps; "parallel" lets v7x's two
    # TensorCores split the batch (no effect on v5e/v6e).
    grid = (n // batch_tile,)
    return pl.pallas_call(
        kernel,
        out_shape=out_shape,
        grid=grid,
        in_specs=[
            pl.BlockSpec((batch_tile, nfeat), lambda i: (i, 0)),   # x tile
            pl.BlockSpec(w1_p.shape, lambda i: (0, 0)),            # W1 (resident)
            pl.BlockSpec(bng.shape, lambda i: (0, 0)),             # b1/gamma/beta
            pl.BlockSpec(w2_p.shape, lambda i: (0, 0)),            # W2 (resident)
            pl.BlockSpec(b2_p.shape, lambda i: (0, 0)),            # b2
        ],
        out_specs=pl.BlockSpec((batch_tile, c_p), lambda i: (i, 0)),
        compiler_params=pltpu.CompilerParams(
            dimension_semantics=("parallel",)),
    )(x, w1_p, bng, w2_p, b2_p)


def init_mlp_params(key, nfeat, nhid, nclass):
    """PyTorch-style Linear init: U(-1/sqrt(fan_in), 1/sqrt(fan_in))."""
    k1, k2, k3, k4, k5, k6 = jax.random.split(key, 6)
    lim1 = 1.0 / float(nfeat) ** 0.5
    w1 = jax.random.uniform(k1, (nfeat, nhid), jnp.float32, -lim1, lim1)
    b1 = jax.random.uniform(k2, (nhid,), jnp.float32, -lim1, lim1)
    lim2 = 1.0 / float(nhid) ** 0.5
    w2 = jax.random.uniform(k3, (nhid, nclass), jnp.float32, -lim2, lim2)
    b2 = jax.random.uniform(k4, (nclass,), jnp.float32, -lim2, lim2)
    # BN affine params randomized slightly (PyTorch default is gamma=1, beta=0)
    # so the gamma/beta path is actually exercised.
    gamma = 1.0 + 0.1 * jax.random.normal(k5, (nhid,), jnp.float32)
    beta = 0.1 * jax.random.normal(k6, (nhid,), jnp.float32)
    return (w1, b1, gamma, beta, w2, b2)


def mlp_reference(x, params, *, use_bn=True, eps=1e-5,
                  matmul_dtype=jnp.bfloat16):
    """Pure-JAX reference of the PyTorch MLP.forward (training-mode BN),
    using the same bf16-operand / f32-accumulate matmul scheme as the kernel."""
    w1, b1, gamma, beta, w2, b2 = params
    h = jnp.dot(x.astype(matmul_dtype), w1.astype(matmul_dtype),
                preferred_element_type=jnp.float32) + b1
    if use_bn:
        mean = jnp.mean(h, axis=0, keepdims=True)
        var = jnp.mean((h - mean) ** 2, axis=0, keepdims=True)
        h = (h - mean) * jax.lax.rsqrt(var + eps) * gamma + beta
    h = jnp.maximum(h, 0.0)
    return jnp.dot(h.astype(matmul_dtype), w2.astype(matmul_dtype),
                   preferred_element_type=jnp.float32) + b2


if __name__ == "__main__":
    BATCH, NFEAT, NHID, NCLASS = 64, 16, 32, 8

    key = jax.random.PRNGKey(0)
    key, xkey, pkey = jax.random.split(key, 3)

    x = jax.random.normal(xkey, (BATCH, NFEAT), jnp.float32)
    params = init_mlp_params(pkey, NFEAT, NHID, NCLASS)
    prepped = prepare_mlp_params(params)   # one-time padding + bf16 cast

    # Path 1: fused single-block kernel with training-mode BatchNorm.
    out_pad = jax.block_until_ready(mlp_forward(x, prepped, use_bn=True))
    out = out_pad[:, :NCLASS]
    ref = mlp_reference(x, params, use_bn=True)
    assert out.shape == (BATCH, NCLASS), out.shape
    assert jnp.allclose(out, ref, atol=1e-2, rtol=1e-2), float(
        jnp.max(jnp.abs(out - ref)))

    # Path 2: batch-tiled ("parallel") grid without BatchNorm.
    out2_pad = jax.block_until_ready(
        mlp_forward(x, prepped, use_bn=False, batch_tile=32))
    out2 = out2_pad[:, :NCLASS]
    ref2 = mlp_reference(x, params, use_bn=False)
    assert jnp.allclose(out2, ref2, atol=1e-2, rtol=1e-2), float(
        jnp.max(jnp.abs(out2 - ref2)))

    print("KERNEL_OK")
</pallas_src>

<mosaic_0001>
module attributes {stable_mosaic.version = 11 : i64} {
  func.func @_mlp_kernel(%arg0: memref<64x16xf32, #tpu.memory_space<vmem>>, %arg1: memref<16x128xbf16, #tpu.memory_space<vmem>>, %arg2: memref<3x128xf32, #tpu.memory_space<vmem>>, %arg3: memref<128x128xbf16, #tpu.memory_space<vmem>>, %arg4: memref<1x128xf32, #tpu.memory_space<vmem>>, %arg5: memref<64x128xf32, #tpu.memory_space<vmem>>) attributes {dimension_semantics = [], scalar_prefetch = 0 : i64, scratch_operands = 0 : i64, tpu.core_type = #tpu.core_type<tc>} {
    %c0 = arith.constant 0 : index
    %c0_0 = arith.constant 0 : index
    %0 = vector.load %arg0[%c0, %c0_0] : memref<64x16xf32, #tpu.memory_space<vmem>>, vector<64x16xf32>
    %1 = arith.truncf %0 : vector<64x16xf32> to vector<64x16xbf16>
    %c0_1 = arith.constant 0 : index
    %c0_2 = arith.constant 0 : index
    %2 = vector.load %arg1[%c0_1, %c0_2] : memref<16x128xbf16, #tpu.memory_space<vmem>>, vector<16x128xbf16>
    %cst = arith.constant dense<0.000000e+00> : vector<64x128xf32>
    %3 = tpu.matmul %1, %2, %cst {dimension_numbers = #tpu.dot_dimension_numbers<[1], [0], [0], [1], [0, 0, 1, 1], [], []>} : vector<64x16xbf16>, vector<16x128xbf16>, vector<64x128xf32> -> vector<64x128xf32>
    %c0_3 = arith.constant 0 : index
    %c0_4 = arith.constant 0 : index
    %4 = vector.load %arg2[%c0_3, %c0_4] : memref<3x128xf32, #tpu.memory_space<vmem>>, vector<3x128xf32>
    %5 = vector.extract_strided_slice %4 {offsets = [0, 0], sizes = [1, 128], strides = [1, 1]} : vector<3x128xf32> to vector<1x128xf32>
    %6 = vector.broadcast %5 : vector<1x128xf32> to vector<64x128xf32>
    %7 = arith.addf %3, %6 : vector<64x128xf32>
    %cst_5 = arith.constant dense<0.000000e+00> : vector<128xf32>
    %8 = vector.multi_reduction <add>, %7, %cst_5 [0] : vector<64x128xf32> to vector<128xf32>
    %9 = vector.shape_cast %8 : vector<128xf32> to vector<1x128xf32>
    %cst_6 = arith.constant 6.400000e+01 : f32
    %10 = vector.broadcast %cst_6 : f32 to vector<1x128xf32>
    %11 = arith.divf %9, %10 : vector<1x128xf32>
    %12 = vector.broadcast %11 : vector<1x128xf32> to vector<64x128xf32>
    %13 = arith.subf %7, %12 : vector<64x128xf32>
    %14 = arith.mulf %13, %13 : vector<64x128xf32>
    %cst_7 = arith.constant dense<0.000000e+00> : vector<128xf32>
    %15 = vector.multi_reduction <add>, %14, %cst_7 [0] : vector<64x128xf32> to vector<128xf32>
    %16 = vector.shape_cast %15 : vector<128xf32> to vector<1x128xf32>
    %cst_8 = arith.constant 6.400000e+01 : f32
    %17 = vector.broadcast %cst_8 : f32 to vector<1x128xf32>
    %18 = arith.divf %16, %17 : vector<1x128xf32>
    %cst_9 = arith.constant 9.99999974E-6 : f32
    %19 = vector.broadcast %cst_9 : f32 to vector<1x128xf32>
    %20 = arith.addf %18, %19 : vector<1x128xf32>
    %21 = math.rsqrt %20 : vector<1x128xf32>
    %22 = vector.broadcast %21 : vector<1x128xf32> to vector<64x128xf32>
    %23 = arith.mulf %13, %22 : vector<64x128xf32>
    %24 = vector.extract_strided_slice %4 {offsets = [1, 0], sizes = [1, 128], strides = [1, 1]} : vector<3x128xf32> to vector<1x128xf32>
    %25 = vector.broadcast %24 : vector<1x128xf32> to vector<64x128xf32>
    %26 = arith.mulf %23, %25 : vector<64x128xf32>
    %27 = vector.extract_strided_slice %4 {offsets = [2, 0], sizes = [1, 128], strides = [1, 1]} : vector<3x128xf32> to vector<1x128xf32>
    %28 = vector.broadcast %27 : vector<1x128xf32> to vector<64x128xf32>
    %29 = arith.addf %26, %28 : vector<64x128xf32>
    %cst_10 = arith.constant 0.000000e+00 : f32
    %30 = vector.broadcast %cst_10 : f32 to vector<64x128xf32>
    %31 = arith.maximumf %29, %30 : vector<64x128xf32>
    %32 = arith.truncf %31 : vector<64x128xf32> to vector<64x128xbf16>
    %c0_11 = arith.constant 0 : index
    %c0_12 = arith.constant 0 : index
    %33 = vector.load %arg3[%c0_11, %c0_12] : memref<128x128xbf16, #tpu.memory_space<vmem>>, vector<128x128xbf16>
    %cst_13 = arith.constant dense<0.000000e+00> : vector<64x128xf32>
    %34 = tpu.matmul %32, %33, %cst_13 {dimension_numbers = #tpu.dot_dimension_numbers<[1], [0], [0], [1], [0, 0, 1, 1], [], []>} : vector<64x128xbf16>, vector<128x128xbf16>, vector<64x128xf32> -> vector<64x128xf32>
    %c0_14 = arith.constant 0 : index
    %c0_15 = arith.constant 0 : index
    %35 = vector.load %arg4[%c0_14, %c0_15] : memref<1x128xf32, #tpu.memory_space<vmem>>, vector<1x128xf32>
    %36 = vector.broadcast %35 : vector<1x128xf32> to vector<64x128xf32>
    %37 = arith.addf %34, %36 : vector<64x128xf32>
    %c0_16 = arith.constant 0 : index
    %c0_17 = arith.constant 0 : index
    %38 = vector.load %arg5[%c0_16, %c0_17] : memref<64x128xf32, #tpu.memory_space<vmem>>, vector<64x128xf32>
    tpu.vector_store %arg5[%c0_16, %c0_17], %37 {strides = array<i32>} : memref<64x128xf32, #tpu.memory_space<vmem>>, vector<64x128xf32>,
    return
  }
}

</mosaic_0001>

<llo_original>
// kernel: tpu_custom_call.1
$region0: #{tpu_custom_call.1}
  #allocation0 [shape = 'u32[]', space=smem, size = 0x4, offset = 0x4, fixed_abs, tag = 'smem constant byte address 0x4 - core index']
  #allocation1 [shape = 'u32[144,128]{1,0:T(1,128)}', space=vmem, size = 0x12000, scoped, tag = 'internal scratch']
  %s0 = inlined_call_operand.vmem [shape: f32[64,16], index: 0, kind: input, shape index: {}]
  %s1 = inlined_call_operand.vmem [shape: bf16[16,128], index: 1, kind: input, shape index: {}]
  %s2 = inlined_call_operand.vmem [shape: f32[3,128], index: 2, kind: input, shape index: {}]
  %s3 = inlined_call_operand.vmem [shape: bf16[128,128], index: 3, kind: input, shape index: {}]
  %s4 = inlined_call_operand.vmem [shape: f32[1,128], index: 4, kind: input, shape index: {}]
  %s5 = inlined_call_operand.hbm [shape: f32[64,128], index: 5, kind: output, shape index: {}]
  %s6 = sld [smem:[#allocation0]]
  $region30: #{tpu_custom_call.1} parent=0
    _
  %s8 = ssub.s32 1, %s6
  %s9 = scalar_select 0, %s8, %s6
  $region1: #{tpu_custom_call.1} parent=0
    #allocation2 [shape = 'u8[32768]{0}', space=vmem, size = 0x8000, scoped, tag = 'output window, operand 0, single buffered']
    #allocation3 [shape = 's32[1]{0}', space=sflag, size = 0x4, scoped, tag = 'scoped memory for tpu_custom_call.1']
    %10 = vsyncpa [#allocation3], 0
    // Predicated region
    $region2: #{tpu_custom_call.1} parent=1 // pred_check
      _
    $region3: #{tpu_custom_call.1} parent=1 // pred_check_branch
      %12 = sbr.rel (0) target = $region5
    $region4: #{tpu_custom_call.1} parent=1 // pred_region
      _
    $region5: #{tpu_custom_call.1} parent=1 // pred_fallthru
      _
    // Predicated region
    $region6: #{tpu_custom_call.1} parent=1 // pred_check
      _
    $region7: #{tpu_custom_call.1} parent=1 // pred_check_branch
      %14 = sbr.rel (0) target = $region9
    $region8: #{tpu_custom_call.1} parent=1 // pred_region
      _
    $region9: #{tpu_custom_call.1} parent=1 // pred_fallthru
      _
    // Predicated region
    $region10: #{tpu_custom_call.1} parent=1 // pred_check
      _
    $region11: #{tpu_custom_call.1} parent=1 // pred_check_branch
      %16 = sbr.rel (0) target = $region13
    $region12: #{tpu_custom_call.1} parent=1 // pred_region
      _
    $region13: #{tpu_custom_call.1} parent=1 // pred_fallthru
      _
    // Predicated region
    $region14: #{tpu_custom_call.1} parent=1 // pred_check
      _
    $region15: #{tpu_custom_call.1} parent=1 // pred_check_branch
      %18 = sbr.rel (0) target = $region17
    $region16: #{tpu_custom_call.1} parent=1 // pred_region
      _
    $region17: #{tpu_custom_call.1} parent=1 // pred_fallthru
      _
    // Predicated region
    $region18: #{tpu_custom_call.1} parent=1 // pred_check
      _
    $region19: #{tpu_custom_call.1} parent=1 // pred_check_branch
      %20 = sbr.rel (0) target = $region21
    $region20: #{tpu_custom_call.1} parent=1 // pred_region
      _
    $region21: #{tpu_custom_call.1} parent=1 // pred_fallthru
      _
    %v22 = vld [vmem:[%s0] sm:$0xff]
    %v23 = vld [vmem:[%s0 + $0x8] sm:$0xff]
    %v24 = vld [vmem:[%s0 + $0x10] sm:$0xff]
    %v25 = vld [vmem:[%s0 + $0x18] sm:$0xff]
    %v26 = vld [vmem:[%s0 + $0x20] sm:$0xff]
    %v27 = vld [vmem:[%s0 + $0x28] sm:$0xff]
    %v28 = vld [vmem:[%s0 + $0x30] sm:$0xff]
    %v29 = vld [vmem:[%s0 + $0x38] sm:$0xff]
    %v30 = vpack.c.bf16 %v23, %v22
    %v31 = vpack.c.bf16 %v25, %v24
    %v32 = vpack.c.bf16 %v27, %v26
    %v33 = vpack.c.bf16 %v29, %v28
    %v34 = vld [vmem:[%s1] sm:$0xf]
    %v35 = vld [vmem:[%s1 + $0x4] sm:$0xf]
    %v36 = vld [vmem:[%s2] sm:$0x7]
    %v37 = vlaneseq
    %v38 = vshrl.u32 %v37, 7
    %v39 = vsub.s32 0, %v38
    %v40 = vrot.slane %v36, %v39
    %v43 = vunpack.c.l.b16 %v34
    %v44 = vunpack.c.l.b16 %v35
    %v45 = vpack.c.b16 %v44, %v43
    %vm47 = vcmask 130048
    %v49 = vsel %vm47, %v30, 0
    %v52 = vsel %vm47, %v31, 0
    %v55 = vsel %vm47, %v32, 0
    %v58 = vsel %vm47, %v33, 0
    %60 = vmatprep.subr.bf16.mxu0 0
    %61 = vmatpush1.bf16.msra.mxu0 %v45
    %62 = vmatprep.subr.bf16.mxu0 0
    %63 = vmatpush1.bf16.msra.mxu0 0
    %64 = vmatprep.subr.bf16.mxu0 0
    %65 = vmatpush1.bf16.msra.mxu0 0
    %66 = vmatprep.subr.bf16.mxu0 0
    %67 = vmatpush1.bf16.msra.mxu0 0
    %68 = vmatprep.subr.bf16.mxu0 0
    %69 = vmatpush1.bf16.msra.mxu0 0
    %70 = vmatprep.subr.bf16.mxu0 0
    %71 = vmatpush1.bf16.msra.mxu0 0
    %72 = vmatprep.subr.bf16.mxu0 0
    %73 = vmatpush1.bf16.msra.mxu0 0
    %74 = vmatprep.subr.bf16.mxu0 0
    %75 = vmatpush1.bf16.msra.mxu0 0
    %76 = vmatprep.subr.bf16.mxu0 0
    %77 = vmatpush1.bf16.msra.mxu0 0
    %78 = vmatprep.subr.bf16.mxu0 0
    %79 = vmatpush1.bf16.msra.mxu0 0
    %80 = vmatprep.subr.bf16.mxu0 0
    %81 = vmatpush1.bf16.msra.mxu0 0
    %82 = vmatprep.subr.bf16.mxu0 0
    %83 = vmatpush1.bf16.msra.mxu0 0
    %84 = vmatprep.subr.bf16.mxu0 0
    %85 = vmatpush1.bf16.msra.mxu0 0
    %86 = vmatprep.subr.bf16.mxu0 0
    %87 = vmatpush1.bf16.msra.mxu0 0
    %88 = vmatprep.subr.bf16.mxu0 0
    %89 = vmatpush1.bf16.msra.mxu0 0
    %90 = vmatprep.subr.bf16.mxu0 0
    %91 = vmatpush1.bf16.msra.mxu0 0
    %92 = vmatprep.mubr.bf16.mxu0 0
    %93 = vmatmul.mubr.bf16.gmra.mrb[0].mxu0 %v49
    %v94 = vpop.f32.mrb[0].mxu0
    %v95 = vadd.f32 %v40, %v94
    %v96 = vpop.f32.mrb[0].mxu0
    %v97 = vpop.f32.mrb[0].mxu0
    %v98 = vadd.f32 %v40, %v97
    %v99 = vpop.f32.mrb[0].mxu0
    %100 = vmatprep.mubr.bf16.mxu0 0
    %101 = vmatmul.mubr.bf16.gmra.mrb[0].mxu0 %v52
    %v102 = vpop.f32.mrb[0].mxu0
    %v103 = vadd.f32 %v40, %v102
    %v104 = vpop.f32.mrb[0].mxu0
    %v105 = vpop.f32.mrb[0].mxu0
    %v106 = vadd.f32 %v40, %v105
    %v107 = vpop.f32.mrb[0].mxu0
    %108 = vmatprep.mubr.bf16.mxu0 0
    %109 = vmatmul.mubr.bf16.gmra.mrb[0].mxu0 %v55
    %v110 = vpop.f32.mrb[0].mxu0
    %v111 = vadd.f32 %v40, %v110
    %v112 = vpop.f32.mrb[0].mxu0
    %v113 = vpop.f32.mrb[0].mxu0
    %v114 = vadd.f32 %v40, %v113
    %v115 = vpop.f32.mrb[0].mxu0
    %116 = vmatprep.mubr.bf16.mxu0 0
    %117 = vmatmul.mubr.bf16.gmra.mrb[0].mxu0 %v58
    %v118 = vpop.f32.mrb[0].mxu0
    %v119 = vadd.f32 %v40, %v118
    %v120 = vpop.f32.mrb[0].mxu0
    %v121 = vpop.f32.mrb[0].mxu0
    %v122 = vadd.f32 %v40, %v121
    %v123 = vpop.f32.mrb[0].mxu0
    %124 = vdwg.mxu0
    %v125 = vadd.f32 %v95, %v98
    %v126 = vadd.f32 %v125, %v103
    %v127 = vadd.f32 %v126, %v106
    %v128 = vadd.f32 %v127, %v111
    %v129 = vadd.f32 %v128, %v114
    %v130 = vadd.f32 %v129, %v119
    %v131 = vadd.f32 %v130, %v122
    %v132 = vrot.slane %v131, 4
    %v133 = vadd.f32 %v131, %v132
    %v134 = vrot.slane %v133, 2
    %v135 = vadd.f32 %v133, %v134
    %v136 = vrot.slane %v135, 1
    %v137 = vadd.f32 %v135, %v136
    %v138 = vrcp.pop 64.0
    %v139 = vmul.f32 %v137, %v138
    %v140 = vsub.f32 %v95, %v139
    %v141 = vsub.f32 %v98, %v139
    %v142 = vsub.f32 %v103, %v139
    %v143 = vsub.f32 %v106, %v139
    %v144 = vsub.f32 %v111, %v139
    %v145 = vsub.f32 %v114, %v139
    %v146 = vsub.f32 %v119, %v139
    %v147 = vsub.f32 %v122, %v139
    %v148 = vmul.f32 %v140, %v140
    %v149 = vmul.f32 %v141, %v141
    %v150 = vmul.f32 %v142, %v142
    %v151 = vmul.f32 %v143, %v143
    %v152 = vmul.f32 %v144, %v144
    %v153 = vmul.f32 %v145, %v145
    %v154 = vmul.f32 %v146, %v146
    %v155 = vmul.f32 %v147, %v147
    %v156 = vadd.f32 %v148, %v149
    %v157 = vadd.f32 %v156, %v150
    %v158 = vadd.f32 %v157, %v151
    %v159 = vadd.f32 %v158, %v152
    %v160 = vadd.f32 %v159, %v153
    %v161 = vadd.f32 %v160, %v154
    %v162 = vadd.f32 %v161, %v155
    %v163 = vrot.slane %v162, 4
    %v164 = vadd.f32 %v162, %v163
    %v165 = vrot.slane %v164, 2
    %v166 = vadd.f32 %v164, %v165
    %v167 = vrot.slane %v166, 1
    %v168 = vadd.f32 %v166, %v167
    %v169 = vmul.f32 %v168, %v138
    %v170 = vadd.f32 %v169, 1e-05
    %v171 = vrsqrt.pop %v170
    %v172 = vmul.f32 %v140, %v171
    %v173 = vmul.f32 %v141, %v171
    %v174 = vmul.f32 %v142, %v171
    %v175 = vmul.f32 %v143, %v171
    %v176 = vmul.f32 %v144, %v171
    %v177 = vmul.f32 %v145, %v171
    %v178 = vmul.f32 %v146, %v171
    %v179 = vmul.f32 %v147, %v171
    %v180 = vlaneseq
    %v181 = vshrl.u32 %v180, 7
    %v182 = vsub.s32 1, %v181
    %v183 = vrot.slane %v36, %v182
    %v184 = vmul.f32 %v172, %v183
    %v185 = vmul.f32 %v173, %v183
    %v186 = vmul.f32 %v174, %v183
    %v187 = vmul.f32 %v175, %v183
    %v188 = vmul.f32 %v176, %v183
    %v189 = vmul.f32 %v177, %v183
    %v190 = vmul.f32 %v178, %v183
    %v191 = vmul.f32 %v179, %v183
    %v192 = vlaneseq
    %v193 = vshrl.u32 %v192, 7
    %v194 = vsub.s32 2, %v193
    %v195 = vrot.slane %v36, %v194
    %v196 = vadd.f32 %v184, %v195
    %v197 = vadd.f32 %v185, %v195
    %v198 = vadd.f32 %v186, %v195
    %v199 = vadd.f32 %v187, %v195
    %v200 = vadd.f32 %v188, %v195
    %v201 = vadd.f32 %v189, %v195
    %v202 = vadd.f32 %v190, %v195
    %v203 = vadd.f32 %v191, %v195
    %v204 = vmax.f32 %v196, 0.0
    %v205 = vmax.f32 %v197, 0.0
    %v206 = vmax.f32 %v198, 0.0
    %v207 = vmax.f32 %v199, 0.0
    %v208 = vmax.f32 %v200, 0.0
    %v209 = vmax.f32 %v201, 0.0
    %v210 = vmax.f32 %v202, 0.0
    %v211 = vmax.f32 %v203, 0.0
    %v212 = vpack.c.bf16 %v205, %v204
    %v213 = vpack.c.bf16 %v207, %v206
    %v214 = vpack.c.bf16 %v209, %v208
    %v215 = vpack.c.bf16 %v211, %v210
    %v216 = vld [vmem:[%s3] sm:$0xf]
    %v217 = vld [vmem:[%s3 + $0x4] sm:$0xf]
    %v218 = vld [vmem:[%s3 + $0x8] sm:$0xf]
    %v219 = vld [vmem:[%s3 + $0xc] sm:$0xf]
    %v220 = vld [vmem:[%s3 + $0x10] sm:$0xf]
    %v221 = vld [vmem:[%s3 + $0x14] sm:$0xf]
    %v222 = vld [vmem:[%s3 + $0x18] sm:$0xf]
    %v223 = vld [vmem:[%s3 + $0x1c] sm:$0xf]
    %v224 = vld [vmem:[%s3 + $0x20] sm:$0xf]
    %v225 = vld [vmem:[%s3 + $0x24] sm:$0xf]
    %v226 = vld [vmem:[%s3 + $0x28] sm:$0xf]
    %v227 = vld [vmem:[%s3 + $0x2c] sm:$0xf]
    %v228 = vld [vmem:[%s3 + $0x30] sm:$0xf]
    %v229 = vld [vmem:[%s3 + $0x34] sm:$0xf]
    %v230 = vld [vmem:[%s3 + $0x38] sm:$0xf]
    %v231 = vld [vmem:[%s3 + $0x3c] sm:$0xf]
    %v232 = vld [vmem:[%s4] sm:$0x1]
    %v234 = vlaneseq
    %v235 = vshrl.u32 %v234, 7
    %v236 = vsub.s32 0, %v235
    %v237 = vrot.slane %v232, %v236
    %v255 = vunpack.c.l.b16 %v216
    %v256 = vunpack.c.l.b16 %v217
    %v257 = vunpack.c.l.b16 %v218
    %v258 = vunpack.c.l.b16 %v219
    %v259 = vunpack.c.l.b16 %v220
    %v260 = vunpack.c.l.b16 %v221
    %v261 = vunpack.c.l.b16 %v222
    %v262 = vunpack.c.l.b16 %v223
    %v263 = vunpack.c.l.b16 %v224
    %v264 = vunpack.c.l.b16 %v225
    %v265 = vunpack.c.l.b16 %v226
    %v266 = vunpack.c.l.b16 %v227
    %v267 = vunpack.c.l.b16 %v228
    %v268 = vunpack.c.l.b16 %v229
    %v269 = vunpack.c.l.b16 %v230
    %v270 = vunpack.c.l.b16 %v231
    %v271 = vpack.c.b16 %v256, %v255
    %v272 = vpack.c.b16 %v258, %v257
    %v273 = vpack.c.b16 %v260, %v259
    %v274 = vpack.c.b16 %v262, %v261
    %v275 = vpack.c.b16 %v264, %v263
    %v276 = vpack.c.b16 %v266, %v265
    %v277 = vpack.c.b16 %v268, %v267
    %v278 = vpack.c.b16 %v270, %v269
    %287 = vmatprep.subr.bf16.mxu0 0
    %288 = vmatpush1.bf16.msra.mxu0 %v271
    %289 = vmatprep.subr.bf16.mxu0 0
    %290 = vmatpush1.bf16.msra.mxu0 %v272
    %291 = vmatprep.subr.bf16.mxu0 0
    %292 = vmatpush1.bf16.msra.mxu0 %v273
    %293 = vmatprep.subr.bf16.mxu0 0
    %294 = vmatpush1.bf16.msra.mxu0 %v274
    %295 = vmatprep.subr.bf16.mxu0 0
    %296 = vmatpush1.bf16.msra.mxu0 %v275
    %297 = vmatprep.subr.bf16.mxu0 0
    %298 = vmatpush1.bf16.msra.mxu0 %v276
    %299 = vmatprep.subr.bf16.mxu0 0
    %300 = vmatpush1.bf16.msra.mxu0 %v277
    %301 = vmatprep.subr.bf16.mxu0 0
    %302 = vmatpush1.bf16.msra.mxu0 %v278
    %303 = vmatprep.subr.bf16.mxu0 0
    %304 = vmatpush1.bf16.msra.mxu0 0
    %305 = vmatprep.subr.bf16.mxu0 0
    %306 = vmatpush1.bf16.msra.mxu0 0
    %307 = vmatprep.subr.bf16.mxu0 0
    %308 = vmatpush1.bf16.msra.mxu0 0
    %309 = vmatprep.subr.bf16.mxu0 0
    %310 = vmatpush1.bf16.msra.mxu0 0
    %311 = vmatprep.subr.bf16.mxu0 0
    %312 = vmatpush1.bf16.msra.mxu0 0
    %313 = vmatprep.subr.bf16.mxu0 0
    %314 = vmatpush1.bf16.msra.mxu0 0
    %315 = vmatprep.subr.bf16.mxu0 0
    %316 = vmatpush1.bf16.msra.mxu0 0
    %317 = vmatprep.subr.bf16.mxu0 0
    %318 = vmatpush1.bf16.msra.mxu0 0
    %319 = vmatprep.mubr.bf16.mxu0 0
    %320 = vmatmul.mubr.bf16.gmra.mrb[0].mxu0 %v212
    %v321 = vpop.f32.mrb[0].mxu0
    %v322 = vadd.f32 %v237, %v321
    %v323 = vpop.f32.mrb[0].mxu0
    %v324 = vpop.f32.mrb[0].mxu0
    %v325 = vadd.f32 %v237, %v324
    %v326 = vpop.f32.mrb[0].mxu0
    %327 = vmatprep.mubr.bf16.mxu0 0
    %328 = vmatmul.mubr.bf16.gmra.mrb[0].mxu0 %v213
    %v329 = vpop.f32.mrb[0].mxu0
    %v330 = vadd.f32 %v237, %v329
    %v331 = vpop.f32.mrb[0].mxu0
    %v332 = vpop.f32.mrb[0].mxu0
    %v333 = vadd.f32 %v237, %v332
    %v334 = vpop.f32.mrb[0].mxu0
    %335 = vmatprep.mubr.bf16.mxu0 0
    %336 = vmatmul.mubr.bf16.gmra.mrb[0].mxu0 %v214
    %v337 = vpop.f32.mrb[0].mxu0
    %v338 = vadd.f32 %v237, %v337
    %v339 = vpop.f32.mrb[0].mxu0
    %v340 = vpop.f32.mrb[0].mxu0
    %v341 = vadd.f32 %v237, %v340
    %v342 = vpop.f32.mrb[0].mxu0
    %343 = vmatprep.mubr.bf16.mxu0 0
    %344 = vmatmul.mubr.bf16.gmra.mrb[0].mxu0 %v215
    %v345 = vpop.f32.mrb[0].mxu0
    %v346 = vadd.f32 %v237, %v345
    %v347 = vpop.f32.mrb[0].mxu0
    %v348 = vpop.f32.mrb[0].mxu0
    %v349 = vadd.f32 %v237, %v348
    %v350 = vpop.f32.mrb[0].mxu0
    %351 = vdwg.mxu0
    %352 = vst [vmem:[#allocation2] sm:$0xff] %v322
    %353 = vst [vmem:[#allocation2 + $0x8] sm:$0xff] %v325
    %354 = vst [vmem:[#allocation2 + $0x10] sm:$0xff] %v330
    %355 = vst [vmem:[#allocation2 + $0x18] sm:$0xff] %v333
    %356 = vst [vmem:[#allocation2 + $0x20] sm:$0xff] %v338
    %357 = vst [vmem:[#allocation2 + $0x28] sm:$0xff] %v341
    %358 = vst [vmem:[#allocation2 + $0x30] sm:$0xff] %v346
    %359 = vst [vmem:[#allocation2 + $0x38] sm:$0xff] %v349
    // Predicated region
    $region22: #{tpu_custom_call.1} parent=1 // pred_check
      _
    $region23: #{tpu_custom_call.1} parent=1 // pred_check_branch
      %361 = sbr.rel (0) target = $region25
    $region24: #{tpu_custom_call.1} parent=1 // pred_region
      %s363 = ssub.s32 1024, 1024
      %364 = vsyncadd [#allocation3], %s363
      %s365 = sshll.u32 [#allocation2], 4
      %s366 = int_to_ptr.vmem [resolvable:$true] %s365
      %371 = dma.vmem_to_hbm [thread:$0]  %s366, 1024, %s5, [#allocation3], 128, 128, 8
    $region25: #{tpu_custom_call.1} parent=1 // pred_fallthru
      _
    // Predicated region
    $region26: #{tpu_custom_call.1} parent=1 // pred_check
      _
    $region27: #{tpu_custom_call.1} parent=1 // pred_check_branch
      %373 = sbr.rel (0) target = $region29
    $region28: #{tpu_custom_call.1} parent=1 // pred_region
      %374 = dma.done [#allocation3], 1024
    $region29: #{tpu_custom_call.1} parent=1 // pred_fallthru
      _
    %375 = vsyncpa [#allocation3], 1

</llo_original>
